<compile_context>
chip_gen: v7x
topology: tpu7x:2x2x1
jax: 0.10.0
libtpu: 0.0.40
codegen_flags: <defaults>
</compile_context>

<pallas_src>
import jax
import jax.numpy as jnp
from jax.experimental import pallas as pl
from jax.experimental.pallas import tpu as pltpu


def _lm_head_loss_kernel(x_ref, w_ref, b_ref, lab_ref,
                         logits_ref, nll_ref,
                         m_s, l_s, lab_s):
    """One (row-tile, vocab-tile) grid step.

    x_ref      : [tn, H]   bf16   embedded tokens (row tile)
    w_ref      : [H, tv]   bf16   LM head weight (vocab tile)
    b_ref      : [1, tv]   f32    LM head bias (vocab tile)
    lab_ref    : [tn, 1]   int32  label token ids (row tile)
    logits_ref : [tn, tv]  bf16   output logits tile
    nll_ref    : [tn, 1]   f32    per-token NLL (written at last vocab tile)
    m_s, l_s, lab_s : [tn, 1] f32 VMEM scratch (running max / sumexp / label logit)
    """
    j = pl.program_id(1)

    @pl.when(j == 0)
    def _init():
        m_s[...] = jnp.full_like(m_s, -jnp.inf)
        l_s[...] = jnp.zeros_like(l_s)
        lab_s[...] = jnp.zeros_like(lab_s)

    # MXU: bf16 @ bf16 -> f32 accumulate, then f32 bias add on the VPU.
    logits = jnp.dot(x_ref[...], w_ref[...],
                     preferred_element_type=jnp.float32) + b_ref[...]
    logits_ref[...] = logits.astype(logits_ref.dtype)

    tn, tv = logits.shape

    # Online logsumexp over the vocab (lane) axis, accumulated across vocab tiles.
    # max/sum go to the XLU, exp to the EUP -- both off the VALU critical path.
    m_prev = m_s[...]
    m_new = jnp.maximum(m_prev, jnp.max(logits, axis=-1, keepdims=True))
    l_s[...] = (l_s[...] * jnp.exp(m_prev - m_new)
                + jnp.sum(jnp.exp(logits - m_new), axis=-1, keepdims=True))
    m_s[...] = m_new

    # Label-logit gather without a materialized one-hot: compare the global
    # column index of this vocab tile against each row's label id.
    # TODO(synk): if V is ever padded past the true vocab, mask padded columns
    #             (col >= true_V) to -inf before the max/exp above.
    col = jax.lax.broadcasted_iota(jnp.int32, (tn, tv), 1) + j * tv
    hit = col == lab_ref[...]                                   # [tn, tv] bool
    lab_s[...] += jnp.sum(jnp.where(hit, logits, 0.0), axis=-1, keepdims=True)

    @pl.when(j == pl.num_programs(1) - 1)
    def _finalize():
        # per-token NLL = logsumexp(logits) - logit_at_label
        nll_ref[...] = (m_s[...] + jnp.log(l_s[...])) - lab_s[...]


def poet_model_forward(input_ids, labels, attention_mask, params,
                       *, block_n=512, block_v=2048,
                       logits_dtype=jnp.bfloat16):
    """Concrete realization of PoetModelInterface.forward.

    input_ids      : [B, T] int32
    labels         : [B, T] int32
    attention_mask : [B, T] int / float (1 = real token, 0 = pad)
    params         : (emb_table [V,H] f32, w_head [H,V] bf16, b_head [1,V] f32)
    Returns (logits [B, T, V] `logits_dtype`, loss scalar f32).
    """
    emb_table, w_head, b_head = params
    B, T = input_ids.shape
    H, V = w_head.shape
    N = B * T

    block_n = min(block_n, N)
    block_v = min(block_v, V)
    assert N % block_n == 0 and block_n % 8 == 0, (N, block_n)
    assert V % block_v == 0 and block_v % 128 == 0, (V, block_v)
    assert H % 128 == 0, H

    # Glue (plain JAX): embedding gather + bf16 cast for the MXU input (XLA
    # fuses the cast into the gather).
    # TODO(synk): for very large H, fuse the gather in-kernel via a manual DMA
    #             gather (memory_space=pl.ANY) to avoid the [N,H] HBM round trip.
    x = emb_table[input_ids.reshape(N)].astype(jnp.bfloat16)     # [N, H]
    lab = labels.reshape(N, 1).astype(jnp.int32)                 # [N, 1]

    grid = (N // block_n, V // block_v)

    logits_bytes = int(jnp.dtype(logits_dtype).itemsize)
    cost = pl.CostEstimate(
        flops=2 * N * H * V,
        transcendentals=N * V,
        bytes_accessed=(N * H * 2                  # x read once per row tile
                        + H * V * 2 * grid[0]      # weights re-read per row tile
                        + V * 4 * grid[0]          # bias re-read per row tile
                        + N * 4                    # labels
                        + N * V * logits_bytes     # logits writeback
                        + N * 4),                  # per-token NLL
    )

    logits, nll = pl.pallas_call(
        _lm_head_loss_kernel,
        out_shape=(
            jax.ShapeDtypeStruct((N, V), logits_dtype),
            jax.ShapeDtypeStruct((N, 1), jnp.float32),
        ),
        grid=grid,
        in_specs=[
            pl.BlockSpec((block_n, H), lambda i, j: (i, 0)),   # fetched once per i
            pl.BlockSpec((H, block_v), lambda i, j: (0, j)),   # streamed per j
            pl.BlockSpec((1, block_v), lambda i, j: (0, j)),   # streamed per j
            pl.BlockSpec((block_n, 1), lambda i, j: (i, 0)),   # fetched once per i
        ],
        out_specs=(
            pl.BlockSpec((block_n, block_v), lambda i, j: (i, j)),
            pl.BlockSpec((block_n, 1), lambda i, j: (i, 0)),
        ),
        scratch_shapes=[
            pltpu.VMEM((block_n, 1), jnp.float32),   # running max
            pltpu.VMEM((block_n, 1), jnp.float32),   # running sum exp
            pltpu.VMEM((block_n, 1), jnp.float32),   # gathered label logit
        ],
        compiler_params=pltpu.CompilerParams(
            dimension_semantics=("parallel", "arbitrary"),
            vmem_limit_bytes=32 * 1024 * 1024,
        ),
        cost_estimate=cost,
    )(x, w_head, b_head, lab)

    # Masked mean loss; mask sum is a trivial plain-JAX reduction over N scalars.
    mask = attention_mask.reshape(N).astype(jnp.float32)
    loss = jnp.sum(nll[:, 0] * mask) / jnp.maximum(jnp.sum(mask), 1.0)
    return logits.reshape(B, T, V), loss


def make_params(vocab, hidden, key=None):
    """Deterministic synthetic parameters (no checkpoint loading)."""
    if key is None:
        key = jax.random.PRNGKey(42)
    k_emb, k_w, k_b = jax.random.split(key, 3)
    emb_table = jax.random.normal(k_emb, (vocab, hidden), jnp.float32) * 0.02
    w_head = (jax.random.normal(k_w, (hidden, vocab), jnp.float32)
              * 0.02).astype(jnp.bfloat16)
    b_head = jax.random.normal(k_b, (1, vocab), jnp.float32) * 0.02
    return emb_table, w_head, b_head


if __name__ == "__main__":
    # Small but lane-aligned shapes: H, V multiples of 128 so stores are unmasked
    # and the MXU is not column-starved; tiles chosen to exercise both grid axes.
    B, T, H, V = 2, 8, 128, 256

    key = jax.random.PRNGKey(0)
    k_ids, _ = jax.random.split(key)
    input_ids = jax.random.randint(k_ids, (B, T), 0, V, dtype=jnp.int32)
    labels = input_ids                                    # standard LM labels
    attention_mask = jnp.ones((B, T), dtype=jnp.int32)
    attention_mask = attention_mask.at[:, T - 2:].set(0)  # last 2 positions padded

    params = make_params(vocab=V, hidden=H)

    logits, loss = poet_model_forward(
        input_ids, labels, attention_mask, params,
        block_n=8, block_v=128)                            # grid = (2, 2)
    jax.block_until_ready((logits, loss))

    # Sanity check against a pure-JAX reference (same bf16 matmul inputs).
    emb_table, w_head, b_head = params
    x_ref = emb_table[input_ids.reshape(-1)].astype(jnp.bfloat16)
    logits_ref = jnp.dot(x_ref, w_head,
                         preferred_element_type=jnp.float32) + b_head
    logp_ref = jax.nn.log_softmax(logits_ref, axis=-1)
    nll_ref = -jnp.take_along_axis(logp_ref, labels.reshape(-1, 1), axis=-1)[:, 0]
    m_ref = attention_mask.reshape(-1).astype(jnp.float32)
    loss_ref = jnp.sum(nll_ref * m_ref) / jnp.sum(m_ref)

    assert jnp.allclose(logits.reshape(-1, V).astype(jnp.float32),
                        logits_ref, atol=2e-3), "logits mismatch"
    assert jnp.allclose(loss, loss_ref, atol=1e-4, rtol=1e-4), "loss mismatch"

    print("KERNEL_OK")
</pallas_src>

<mosaic_0001>
module attributes {stable_mosaic.version = 11 : i64} {
  func.func @_lm_head_loss_kernel(%arg0: i32, %arg1: i32, %arg2: memref<8x128xbf16, #tpu.memory_space<vmem>>, %arg3: memref<128x128xbf16, #tpu.memory_space<vmem>>, %arg4: memref<1x128xf32, #tpu.memory_space<vmem>>, %arg5: memref<8x1xi32, #tpu.memory_space<vmem>>, %arg6: memref<8x128xbf16, #tpu.memory_space<vmem>>, %arg7: memref<8x1xf32, #tpu.memory_space<vmem>>, %arg8: memref<8x1xf32, #tpu.memory_space<vmem>>, %arg9: memref<8x1xf32, #tpu.memory_space<vmem>>, %arg10: memref<8x1xf32, #tpu.memory_space<vmem>>) attributes {dimension_semantics = [#tpu.dimension_semantics<parallel>, #tpu.dimension_semantics<arbitrary>], iteration_bounds = array<i64: 2, 2>, scalar_prefetch = 0 : i64, scratch_operands = 3 : i64, tpu.core_type = #tpu.core_type<tc>, window_params = [{transform_indices = @transform_0, window_bounds = array<i64: 8, 128>}, {transform_indices = @transform_1, window_bounds = array<i64: 128, 128>}, {transform_indices = @transform_2, window_bounds = array<i64: 1, 128>}, {transform_indices = @transform_3, window_bounds = array<i64: 8, 1>}, {transform_indices = @transform_4, window_bounds = array<i64: 8, 128>}, {transform_indices = @transform_5, window_bounds = array<i64: 8, 1>}]} {
    %c0_i32 = arith.constant 0 : i32
    %0 = arith.cmpi eq, %arg1, %c0_i32 : i32
    %1 = arith.extui %0 : i1 to i32
    %c0_i32_0 = arith.constant 0 : i32
    %2 = arith.cmpi ne, %1, %c0_i32_0 : i32
    scf.if %2 {
      %cst_27 = arith.constant 0xFF800000 : f32
      %44 = vector.broadcast %cst_27 : f32 to vector<8x1xf32>
      %c0_28 = arith.constant 0 : index
      %c0_29 = arith.constant 0 : index
      %45 = vector.load %arg8[%c0_28, %c0_29] : memref<8x1xf32, #tpu.memory_space<vmem>>, vector<8x1xf32>
      tpu.vector_store %arg8[%c0_28, %c0_29], %44 {strides = array<i32>} : memref<8x1xf32, #tpu.memory_space<vmem>>, vector<8x1xf32>,
      %cst_30 = arith.constant 0.000000e+00 : f32
      %46 = vector.broadcast %cst_30 : f32 to vector<8x1xf32>
      %c0_31 = arith.constant 0 : index
      %c0_32 = arith.constant 0 : index
      %47 = vector.load %arg9[%c0_31, %c0_32] : memref<8x1xf32, #tpu.memory_space<vmem>>, vector<8x1xf32>
      tpu.vector_store %arg9[%c0_31, %c0_32], %46 {strides = array<i32>} : memref<8x1xf32, #tpu.memory_space<vmem>>, vector<8x1xf32>,
      %cst_33 = arith.constant 0.000000e+00 : f32
      %48 = vector.broadcast %cst_33 : f32 to vector<8x1xf32>
      %c0_34 = arith.constant 0 : index
      %c0_35 = arith.constant 0 : index
      %49 = vector.load %arg10[%c0_34, %c0_35] : memref<8x1xf32, #tpu.memory_space<vmem>>, vector<8x1xf32>
      tpu.vector_store %arg10[%c0_34, %c0_35], %48 {strides = array<i32>} : memref<8x1xf32, #tpu.memory_space<vmem>>, vector<8x1xf32>,
    } else {
    }
    %c0 = arith.constant 0 : index
    %c0_1 = arith.constant 0 : index
    %3 = vector.load %arg2[%c0, %c0_1] : memref<8x128xbf16, #tpu.memory_space<vmem>>, vector<8x128xbf16>
    %c0_2 = arith.constant 0 : index
    %c0_3 = arith.constant 0 : index
    %4 = vector.load %arg3[%c0_2, %c0_3] : memref<128x128xbf16, #tpu.memory_space<vmem>>, vector<128x128xbf16>
    %cst = arith.constant dense<0.000000e+00> : vector<8x128xf32>
    %5 = tpu.matmul %3, %4, %cst {dimension_numbers = #tpu.dot_dimension_numbers<[1], [0], [0], [1], [0, 0, 1, 1], [], []>} : vector<8x128xbf16>, vector<128x128xbf16>, vector<8x128xf32> -> vector<8x128xf32>
    %c0_4 = arith.constant 0 : index
    %c0_5 = arith.constant 0 : index
    %6 = vector.load %arg4[%c0_4, %c0_5] : memref<1x128xf32, #tpu.memory_space<vmem>>, vector<1x128xf32>
    %7 = vector.broadcast %6 : vector<1x128xf32> to vector<8x128xf32>
    %8 = arith.addf %5, %7 : vector<8x128xf32>
    %9 = arith.truncf %8 : vector<8x128xf32> to vector<8x128xbf16>
    %c0_6 = arith.constant 0 : index
    %c0_7 = arith.constant 0 : index
    %10 = vector.load %arg6[%c0_6, %c0_7] : memref<8x128xbf16, #tpu.memory_space<vmem>>, vector<8x128xbf16>
    tpu.vector_store %arg6[%c0_6, %c0_7], %9 {strides = array<i32>} : memref<8x128xbf16, #tpu.memory_space<vmem>>, vector<8x128xbf16>,
    %c0_8 = arith.constant 0 : index
    %c0_9 = arith.constant 0 : index
    %11 = vector.load %arg8[%c0_8, %c0_9] : memref<8x1xf32, #tpu.memory_space<vmem>>, vector<8x1xf32>
    %cst_10 = arith.constant dense<0xFF800000> : vector<8xf32>
    %12 = vector.multi_reduction <maximumf>, %8, %cst_10 [1] : vector<8x128xf32> to vector<8xf32>
    %13 = vector.shape_cast %12 : vector<8xf32> to vector<8x1xf32>
    %14 = arith.maximumf %11, %13 : vector<8x1xf32>
    %c0_11 = arith.constant 0 : index
    %c0_12 = arith.constant 0 : index
    %15 = vector.load %arg9[%c0_11, %c0_12] : memref<8x1xf32, #tpu.memory_space<vmem>>, vector<8x1xf32>
    %16 = arith.subf %11, %14 : vector<8x1xf32>
    %17 = math.exp %16 : vector<8x1xf32>
    %18 = arith.mulf %15, %17 : vector<8x1xf32>
    %19 = vector.broadcast %14 : vector<8x1xf32> to vector<8x128xf32>
    %20 = arith.subf %8, %19 : vector<8x128xf32>
    %21 = math.exp %20 : vector<8x128xf32>
    %cst_13 = arith.constant dense<0.000000e+00> : vector<8xf32>
    %22 = vector.multi_reduction <add>, %21, %cst_13 [1] : vector<8x128xf32> to vector<8xf32>
    %23 = vector.shape_cast %22 : vector<8xf32> to vector<8x1xf32>
    %24 = arith.addf %18, %23 : vector<8x1xf32>
    %c0_14 = arith.constant 0 : index
    %c0_15 = arith.constant 0 : index
    %25 = vector.load %arg9[%c0_14, %c0_15] : memref<8x1xf32, #tpu.memory_space<vmem>>, vector<8x1xf32>
    tpu.vector_store %arg9[%c0_14, %c0_15], %24 {strides = array<i32>} : memref<8x1xf32, #tpu.memory_space<vmem>>, vector<8x1xf32>,
    %c0_16 = arith.constant 0 : index
    %c0_17 = arith.constant 0 : index
    %26 = vector.load %arg8[%c0_16, %c0_17] : memref<8x1xf32, #tpu.memory_space<vmem>>, vector<8x1xf32>
    tpu.vector_store %arg8[%c0_16, %c0_17], %14 {strides = array<i32>} : memref<8x1xf32, #tpu.memory_space<vmem>>, vector<8x1xf32>,
    %27 = tpu.iota {dimensions = array<i32: 1>} : vector<8x128xi32>
    %c128_i32 = arith.constant 128 : i32
    %28 = arith.muli %arg1, %c128_i32 : i32
    %29 = vector.broadcast %28 : i32 to vector<8x128xi32>
    %30 = arith.addi %27, %29 : vector<8x128xi32>
    %c0_18 = arith.constant 0 : index
    %c0_19 = arith.constant 0 : index
    %31 = vector.load %arg5[%c0_18, %c0_19] : memref<8x1xi32, #tpu.memory_space<vmem>>, vector<8x1xi32>
    %32 = vector.broadcast %31 : vector<8x1xi32> to vector<8x128xi32>
    %33 = arith.cmpi eq, %30, %32 : vector<8x128xi32>
    %c0_20 = arith.constant 0 : index
    %c0_21 = arith.constant 0 : index
    %34 = vector.load %arg10[%c0_20, %c0_21] : memref<8x1xf32, #tpu.memory_space<vmem>>, vector<8x1xf32>
    %cst_22 = arith.constant 0.000000e+00 : f32
    %35 = vector.broadcast %cst_22 : f32 to vector<8x128xf32>
    %36 = arith.select %33, %8, %35 : vector<8x128xi1>, vector<8x128xf32>
    %cst_23 = arith.constant dense<0.000000e+00> : vector<8xf32>
    %37 = vector.multi_reduction <add>, %36, %cst_23 [1] : vector<8x128xf32> to vector<8xf32>
    %38 = vector.shape_cast %37 : vector<8xf32> to vector<8x1xf32>
    %39 = arith.addf %34, %38 : vector<8x1xf32>
    %c0_24 = arith.constant 0 : index
    %c0_25 = arith.constant 0 : index
    %40 = vector.load %arg10[%c0_24, %c0_25] : memref<8x1xf32, #tpu.memory_space<vmem>>, vector<8x1xf32>
    tpu.vector_store %arg10[%c0_24, %c0_25], %39 {strides = array<i32>} : memref<8x1xf32, #tpu.memory_space<vmem>>, vector<8x1xf32>,
    %c1_i32 = arith.constant 1 : i32
    %41 = arith.cmpi eq, %arg1, %c1_i32 : i32
    %42 = arith.extui %41 : i1 to i32
    %c0_i32_26 = arith.constant 0 : i32
    %43 = arith.cmpi ne, %42, %c0_i32_26 : i32
    scf.if %43 {
      %c0_27 = arith.constant 0 : index
      %c0_28 = arith.constant 0 : index
      %44 = vector.load %arg8[%c0_27, %c0_28] : memref<8x1xf32, #tpu.memory_space<vmem>>, vector<8x1xf32>
      %c0_29 = arith.constant 0 : index
      %c0_30 = arith.constant 0 : index
      %45 = vector.load %arg9[%c0_29, %c0_30] : memref<8x1xf32, #tpu.memory_space<vmem>>, vector<8x1xf32>
      %46 = math.log %45 : vector<8x1xf32>
      %47 = arith.addf %44, %46 : vector<8x1xf32>
      %c0_31 = arith.constant 0 : index
      %c0_32 = arith.constant 0 : index
      %48 = vector.load %arg10[%c0_31, %c0_32] : memref<8x1xf32, #tpu.memory_space<vmem>>, vector<8x1xf32>
      %49 = arith.subf %47, %48 : vector<8x1xf32>
      %c0_33 = arith.constant 0 : index
      %c0_34 = arith.constant 0 : index
      %50 = vector.load %arg7[%c0_33, %c0_34] : memref<8x1xf32, #tpu.memory_space<vmem>>, vector<8x1xf32>
      tpu.vector_store %arg7[%c0_33, %c0_34], %49 {strides = array<i32>} : memref<8x1xf32, #tpu.memory_space<vmem>>, vector<8x1xf32>,
    } else {
    }
    return
  }
  func.func @transform_0(%arg0: i32, %arg1: i32) -> (i32, i32) {
    %c0_i32 = arith.constant 0 : i32
    %c0_i32_0 = arith.constant 0 : i32
    return %arg0, %c0_i32 : i32, i32
  }
  func.func @transform_1(%arg0: i32, %arg1: i32) -> (i32, i32) {
    %c0_i32 = arith.constant 0 : i32
    %c0_i32_0 = arith.constant 0 : i32
    return %c0_i32, %arg1 : i32, i32
  }
  func.func @transform_2(%arg0: i32, %arg1: i32) -> (i32, i32) {
    %c0_i32 = arith.constant 0 : i32
    %c0_i32_0 = arith.constant 0 : i32
    return %c0_i32, %arg1 : i32, i32
  }
  func.func @transform_3(%arg0: i32, %arg1: i32) -> (i32, i32) {
    %c0_i32 = arith.constant 0 : i32
    %c0_i32_0 = arith.constant 0 : i32
    return %arg0, %c0_i32 : i32, i32
  }
  func.func @transform_4(%arg0: i32, %arg1: i32) -> (i32, i32) {
    %c0_i32 = arith.constant 0 : i32
    return %arg0, %arg1 : i32, i32
  }
  func.func @transform_5(%arg0: i32, %arg1: i32) -> (i32, i32) {
    %c0_i32 = arith.constant 0 : i32
    %c0_i32_0 = arith.constant 0 : i32
    return %arg0, %c0_i32 : i32, i32
  }
}

</mosaic_0001>

<llo_original>
// kernel: tpu_custom_call.1
$region0: #{tpu_custom_call.1}
  #allocation0 [shape = 'u32[]', space=smem, size = 0x4, offset = 0x4, fixed_abs, tag = 'smem constant byte address 0x4 - core index']
  #allocation1 [shape = 'u32[144,128]{1,0:T(1,128)}', space=vmem, size = 0x12000, scoped, tag = 'internal scratch']
  #allocation2 [shape = 'f32[8,1]{1,0:T(8,128)}', space=vmem, size = 0x1000, scoped, tag = 'scratch operand']
  #allocation3 [shape = 'f32[8,1]{1,0:T(8,128)}', space=vmem, size = 0x1000, scoped, tag = 'scratch operand']
  #allocation4 [shape = 'f32[8,1]{1,0:T(8,128)}', space=vmem, size = 0x1000, scoped, tag = 'scratch operand']
  %s0 = inlined_call_operand.vmem [shape: bf16[16,128], index: 0, kind: input, shape index: {}]
  %s1 = inlined_call_operand.hbm [shape: bf16[128,256], index: 1, kind: input, shape index: {}]
  %s2 = inlined_call_operand.vmem [shape: f32[1,256], index: 2, kind: input, shape index: {}]
  %s3 = inlined_call_operand.vmem [shape: s32[16,1], index: 3, kind: input, shape index: {}]
  %s4 = inlined_call_operand.hbm [shape: bf16[16,256], index: 4, kind: output, shape index: {0}]
  %s5 = inlined_call_operand.vmem [shape: f32[16,1], index: 5, kind: output, shape index: {1}]
  %6 = xla_tuple %s4, %s5
  %s7 = sld [smem:[#allocation0]]
  $region69: #{tpu_custom_call.1} parent=0
    _
  %s9 = ssub.s32 1, %s7
  %s10 = scalar_select 0, %s9, %s7
  $region1: #{tpu_custom_call.1} parent=0
    #allocation5 [shape = 'u8[65536]{0}', space=vmem, size = 0x10000, scoped, tag = 'input window, operand 1']
    #allocation6 [shape = 's32[2]{0}', space=sflag, size = 0x8, scoped, tag = 'scoped memory for tpu_custom_call.1']
    #allocation7 [shape = 's32[2]{0}', space=sflag, size = 0x8, scoped, tag = 'scoped memory for tpu_custom_call.1']
    #allocation8 [shape = 'u8[4096]{0}', space=vmem, size = 0x1000, scoped, tag = 'output window, operand 0']
    %11 = vsyncpa [#allocation6], 0
    %s12 = scalar_lea.sflag [#allocation6], 1
    %13 = vsyncpa %s12, 0
    %14 = vsyncpa [#allocation7], 0
    %s15 = scalar_lea.sflag [#allocation7], 1
    %16 = vsyncpa %s15, 0
    loop: start=0, step=1, limit=6
    $region2: #{tpu_custom_call.1} parent=1 // loop_pre_header
      _
    $region3: #{tpu_custom_call.1} parent=1 // loop_header
      %s18 = sphi 0, %s22
      %p19 = scmp.ge.s32.totalorder %s18, 6
      %s25 = sphi 0, %s37
      %s26 = sphi 0, %s33
      %s27 = sphi 0, %s25
      %s28 = sphi 0, %s26
      %s29 = sphi 0, %s27
      %s30 = sphi 0, %s28
      %s40 = sphi 0, %s42
      %s43 = sphi 0, %s40
      %s44 = sphi 0, %s43
      %s60 = sphi 0, %s44
      %s66 = sphi 0, %s68
      %s69 = sphi 0, %s66
      %s70 = sphi 0, %s69
      %s86 = sphi 0, %s70
      %s92 = sphi 0, %s94
      %s95 = sphi 0, %s92
      %s96 = sphi 0, %s95
      %s112 = sphi 0, %s96
      %s118 = sphi 0, %s120
      %s121 = sphi 0, %s118
      %s122 = sphi 0, %s121
      %s138 = sphi 0, %s122
      %s146 = sphi 0, %s148
      %s149 = sphi 0, %s146
      %s150 = sphi 0, %s149
      %s166 = sphi 0, %s150
      %s172 = sphi 0, %s174
      %s175 = sphi 0, %s172
      %s176 = sphi 0, %s175
      %s192 = sphi 0, %s176
    $region4: #{tpu_custom_call.1} parent=1 // loop_header_branch
      %21 = sbr.rel (%p19) target = $region8
    $region5: #{tpu_custom_call.1} parent=1 // loop_body
      %s23 = ssub.s32 %s18, 1
      %s24 = ssub.s32 %s18, 2
      %s31 = sadd.s32 1, %s26
      %p32 = scmp.ge.s32.totalorder %s31, 2
      %s33 = scalar_select %p32, 0, %s31
      %s34 = sadd.s32 1, %s25
      %s35 = scalar_select %p32, %s34, %s25
      %p36 = scmp.ge.s32.totalorder %s35, 2
      %s37 = scalar_select %p36, 0, %s35
      %s38 = ssub.s32 %s25, %s37
      %p39 = scmp.eq.s32.totalorder %s38, 0
      %s41 = sadd.s32 %s40, 1
      %s42 = scalar_select %p39, %s40, %s41
      %p45 = pneg %p39
      %p46 = scmp.eq.s32.totalorder %s18, 3
      %p47 = por %p45, %p46
      %p48 = scmp.ne.s32.totalorder %s40, %s43
      %p49 = scmp.eq.s32.totalorder %s18, 0
      %p50 = por %p48, %p49
      %p51 = scmp.ne.s32.totalorder %s40, %s43
      %p52 = scmp.eq.s32.totalorder %s23, 3
      %p53 = por %p51, %p52
      %p54 = scmp.ne.s32.totalorder %s43, %s44
      %p55 = scmp.eq.s32.totalorder %s23, 0
      %p56 = por %p54, %p55
      %p57 = scmp.ne.s32.totalorder %s43, %s44
      %p58 = scmp.eq.s32.totalorder %s24, 3
      %p59 = por %p57, %p58
      %p61 = scmp.ne.s32.totalorder %s44, %s60
      %p62 = scmp.eq.s32.totalorder %s24, 0
      %p63 = por %p61, %p62
      %s64 = ssub.s32 %s26, %s33
      %p65 = scmp.eq.s32.totalorder %s64, 0
      %s67 = sadd.s32 %s66, 1
      %s68 = scalar_select %p65, %s66, %s67
      %p71 = pneg %p65
      %p72 = scmp.eq.s32.totalorder %s18, 3
      %p73 = por %p71, %p72
      %p74 = scmp.ne.s32.totalorder %s66, %s69
      %p75 = scmp.eq.s32.totalorder %s18, 0
      %p76 = por %p74, %p75
      %p77 = scmp.ne.s32.totalorder %s66, %s69
      %p78 = scmp.eq.s32.totalorder %s23, 3
      %p79 = por %p77, %p78
      %p80 = scmp.ne.s32.totalorder %s69, %s70
      %p81 = scmp.eq.s32.totalorder %s23, 0
      %p82 = por %p80, %p81
      %p83 = scmp.ne.s32.totalorder %s69, %s70
      %p84 = scmp.eq.s32.totalorder %s24, 3
      %p85 = por %p83, %p84
      %p87 = scmp.ne.s32.totalorder %s70, %s86
      %p88 = scmp.eq.s32.totalorder %s24, 0
      %p89 = por %p87, %p88
      %s90 = ssub.s32 %s26, %s33
      %p91 = scmp.eq.s32.totalorder %s90, 0
      %s93 = sadd.s32 %s92, 1
      %s94 = scalar_select %p91, %s92, %s93
      %p97 = pneg %p91
      %p98 = scmp.eq.s32.totalorder %s18, 3
      %p99 = por %p97, %p98
      %p100 = scmp.ne.s32.totalorder %s92, %s95
      %p101 = scmp.eq.s32.totalorder %s18, 0
      %p102 = por %p100, %p101
      %p103 = scmp.ne.s32.totalorder %s92, %s95
      %p104 = scmp.eq.s32.totalorder %s23, 3
      %p105 = por %p103, %p104
      %p106 = scmp.ne.s32.totalorder %s95, %s96
      %p107 = scmp.eq.s32.totalorder %s23, 0
      %p108 = por %p106, %p107
      %p109 = scmp.ne.s32.totalorder %s95, %s96
      %p110 = scmp.eq.s32.totalorder %s24, 3
      %p111 = por %p109, %p110
      %p113 = scmp.ne.s32.totalorder %s96, %s112
      %p114 = scmp.eq.s32.totalorder %s24, 0
      %p115 = por %p113, %p114
      %s116 = ssub.s32 %s25, %s37
      %p117 = scmp.eq.s32.totalorder %s116, 0
      %s119 = sadd.s32 %s118, 1
      %s120 = scalar_select %p117, %s118, %s119
      %p123 = pneg %p117
      %p124 = scmp.eq.s32.totalorder %s18, 3
      %p125 = por %p123, %p124
      %p126 = scmp.ne.s32.totalorder %s118, %s121
      %p127 = scmp.eq.s32.totalorder %s18, 0
      %p128 = por %p126, %p127
      %p129 = scmp.ne.s32.totalorder %s118, %s121
      %p130 = scmp.eq.s32.totalorder %s23, 3
      %p131 = por %p129, %p130
      %p132 = scmp.ne.s32.totalorder %s121, %s122
      %p133 = scmp.eq.s32.totalorder %s23, 0
      %p134 = por %p132, %p133
      %p135 = scmp.ne.s32.totalorder %s121, %s122
      %p136 = scmp.eq.s32.totalorder %s24, 3
      %p137 = por %p135, %p136
      %p139 = scmp.ne.s32.totalorder %s122, %s138
      %p140 = scmp.eq.s32.totalorder %s24, 0
      %p141 = por %p139, %p140
      %s142 = ssub.s32 %s25, %s37
      %s143 = ssub.s32 %s26, %s33
      %s144 = sor.u32 %s142, %s143
      %p145 = scmp.eq.s32.totalorder %s144, 0
      %s147 = sadd.s32 %s146, 1
      %s148 = scalar_select %p145, %s146, %s147
      %p151 = pneg %p145
      %p152 = scmp.eq.s32.totalorder %s18, 3
      %p153 = por %p151, %p152
      %p154 = scmp.ne.s32.totalorder %s146, %s149
      %p155 = scmp.eq.s32.totalorder %s18, 0
      %p156 = por %p154, %p155
      %p157 = scmp.ne.s32.totalorder %s146, %s149
      %p158 = scmp.eq.s32.totalorder %s23, 3
      %p159 = por %p157, %p158
      %p160 = scmp.ne.s32.totalorder %s149, %s150
      %p161 = scmp.eq.s32.totalorder %s23, 0
      %p162 = por %p160, %p161
      %p163 = scmp.ne.s32.totalorder %s149, %s150
      %p164 = scmp.eq.s32.totalorder %s24, 3
      %p165 = por %p163, %p164
      %p167 = scmp.ne.s32.totalorder %s150, %s166
      %p168 = scmp.eq.s32.totalorder %s24, 0
      %p169 = por %p167, %p168
      %s170 = ssub.s32 %s25, %s37
      %p171 = scmp.eq.s32.totalorder %s170, 0
      %s173 = sadd.s32 %s172, 1
      %s174 = scalar_select %p171, %s172, %s173
      %p177 = pneg %p171
      %p178 = scmp.eq.s32.totalorder %s18, 3
      %p179 = por %p177, %p178
      %p180 = scmp.ne.s32.totalorder %s172, %s175
      %p181 = scmp.eq.s32.totalorder %s18, 0
      %p182 = por %p180, %p181
      %p183 = scmp.ne.s32.totalorder %s172, %s175
      %p184 = scmp.eq.s32.totalorder %s23, 3
      %p185 = por %p183, %p184
      %p186 = scmp.ne.s32.totalorder %s175, %s176
      %p187 = scmp.eq.s32.totalorder %s23, 0
      %p188 = por %p186, %p187
      %p189 = scmp.ne.s32.totalorder %s175, %s176
      %p190 = scmp.eq.s32.totalorder %s24, 3
      %p191 = por %p189, %p190
      %p193 = scmp.ne.s32.totalorder %s176, %s192
      %p194 = scmp.eq.s32.totalorder %s24, 0
      %p195 = por %p193, %p194
      %p196 = scmp.le.s32.totalorder 1, %s18
      %p197 = scmp.lt.s32.totalorder %s18, 5
      %p198 = pnand %p196, %p197
      %p199 = pneg %p198
      // Predicated region
      $region9: #{tpu_custom_call.1} parent=5 // pred_check
        _
      $region10: #{tpu_custom_call.1} parent=5 // pred_check_branch
        %201 = sbr.rel (%p198) target = $region12
      $region11: #{tpu_custom_call.1} parent=5 // pred_region
        %s202 = ssub.s32 %s18, 1
      $region12: #{tpu_custom_call.1} parent=5 // pred_fallthru
        _
      %p203 = scmp.lt.s32.totalorder %s18, 4
      // Predicated region
      $region13: #{tpu_custom_call.1} parent=5 // pred_check
        %p204 = pneg %p203
      $region14: #{tpu_custom_call.1} parent=5 // pred_check_branch
        %206 = sbr.rel (%p204) target = $region16
      $region15: #{tpu_custom_call.1} parent=5 // pred_region
        // Predicated region
        $region17: #{tpu_custom_call.1} parent=15 // pred_check
          %p207 = pneg %p50
        $region18: #{tpu_custom_call.1} parent=15 // pred_check_branch
          %209 = sbr.rel (%p207) target = $region20
        $region19: #{tpu_custom_call.1} parent=15 // pred_region
          %p210 = scmp.lt.s32.totalorder %s25, 1
          %s211 = scalar_select %p210, %s25, 1
          %s212 = smul.addr %s211, 4
          %s213 = scalar_lea.vmem %s0, %s212
        $region20: #{tpu_custom_call.1} parent=15 // pred_fallthru
          _
        // Predicated region
        $region21: #{tpu_custom_call.1} parent=15 // pred_check
          %p214 = pneg %p76
        $region22: #{tpu_custom_call.1} parent=15 // pred_check_branch
          %216 = sbr.rel (%p214) target = $region24
        $region23: #{tpu_custom_call.1} parent=15 // pred_region
          %s217 = sand.u32 %s66, 1
          %s218 = scalar_lea.sflag [#allocation6], %s217
          %s219 = sand.u32 %s66, 1
          %s220 = smul.addr %s219, 64
          %s221 = scalar_lea.vmem [#allocation5], %s220
          %s223 = ssub.s32 1024, 1024
          %224 = vsyncadd %s218, %s223
          %s225 = smul.addr %s26, 64
          %s226 = scalar_lea.hbm %s1, %s225
          %s227 = sshll.u32 %s221, 4
          %s228 = int_to_ptr.vmem [resolvable:$true] %s227
          %233 = dma.hbm_to_vmem [thread:$0]  %s226, 1024, %s228, %s218, 128, 64, 4
        $region24: #{tpu_custom_call.1} parent=15 // pred_fallthru
          _
        // Predicated region
        $region25: #{tpu_custom_call.1} parent=15 // pred_check
          %p234 = pneg %p102
        $region26: #{tpu_custom_call.1} parent=15 // pred_check_branch
          %236 = sbr.rel (%p234) target = $region28
        $region27: #{tpu_custom_call.1} parent=15 // pred_region
          %p237 = scmp.lt.s32.totalorder %s26, 1
          %s238 = scalar_select %p237, %s26, 1
          %s239 = scalar_lea.vmem %s2, %s238
        $region28: #{tpu_custom_call.1} parent=15 // pred_fallthru
          _
        // Predicated region
        $region29: #{tpu_custom_call.1} parent=15 // pred_check
          %p240 = pneg %p128
        $region30: #{tpu_custom_call.1} parent=15 // pred_check_branch
          %242 = sbr.rel (%p240) target = $region32
        $region31: #{tpu_custom_call.1} parent=15 // pred_region
          %p243 = scmp.lt.s32.totalorder %s25, 1
          %s244 = scalar_select %p243, %s25, 1
          %s245 = smul.addr %s244, 8
          %s246 = scalar_lea.vmem %s3, %s245
        $region32: #{tpu_custom_call.1} parent=15 // pred_fallthru
          _
      $region16: #{tpu_custom_call.1} parent=5 // pred_fallthru
        _
      %p247 = scmp.le.s32.totalorder 1, %s18
      %p248 = scmp.lt.s32.totalorder %s18, 5
      %p249 = pnand %p247, %p248
      %p250 = pneg %p249
      // Predicated region
      $region33: #{tpu_custom_call.1} parent=5 // pred_check
        _
      $region34: #{tpu_custom_call.1} parent=5 // pred_check_branch
        %252 = sbr.rel (%p249) target = $region36
      $region35: #{tpu_custom_call.1} parent=5 // pred_region
        %s253 = ssub.s32 %s18, 1
        %s254 = sand.u32 %s69, 1
        %s255 = scalar_lea.sflag [#allocation6], %s254
        %s256 = sand.u32 %s69, 1
        %s257 = smul.addr %s256, 64
        %s258 = scalar_lea.vmem [#allocation5], %s257
        // Predicated region
        $region37: #{tpu_custom_call.1} parent=35 // pred_check
          %p259 = pneg %p82
        $region38: #{tpu_custom_call.1} parent=35 // pred_check_branch
          %261 = sbr.rel (%p259) target = $region40
        $region39: #{tpu_custom_call.1} parent=35 // pred_region
          %262 = dma.done %s255, 1024
        $region40: #{tpu_custom_call.1} parent=35 // pred_fallthru
          _
        %p263 = scmp.lt.s32.totalorder %s27, 1
        %s264 = scalar_select %p263, %s27, 1
        %s265 = smul.addr %s264, 4
        %s266 = scalar_lea.vmem %s0, %s265
        %p267 = pneg %p56
        %p268 = pneg %p53
        %s269 = sand.u32 %s69, 1
        %s270 = scalar_lea.sflag [#allocation6], %s269
        %s271 = sand.u32 %s69, 1
        %s272 = smul.addr %s271, 64
        %s273 = scalar_lea.vmem [#allocation5], %s272
        %p274 = pneg %p82
        %p275 = pneg %p79
        %p276 = scmp.lt.s32.totalorder %s28, 1
        %s277 = scalar_select %p276, %s28, 1
        %s278 = scalar_lea.vmem %s2, %s277
        %p279 = pneg %p108
        %p280 = pneg %p105
        %p281 = scmp.lt.s32.totalorder %s27, 1
        %s282 = scalar_select %p281, %s27, 1
        %s283 = smul.addr %s282, 8
        %s284 = scalar_lea.vmem %s3, %s283
        %p285 = pneg %p134
        %p286 = pneg %p131
        %p287 = pneg %p162
        %p288 = pneg %p159
        %s289 = sand.u32 %s149, 1
        %s290 = scalar_lea.sflag [#allocation7], %s289
        %s291 = sand.u32 %s149, 1
        %s292 = smul.addr %s291, 4
        %s293 = scalar_lea.vmem [#allocation8], %s292
        %p294 = pneg %p188
        %p295 = pneg %p185
        %p296 = scmp.lt.s32.totalorder %s27, 1
        %s297 = scalar_select %p296, %s27, 1
        %s298 = smul.addr %s297, 8
        %s299 = scalar_lea.vmem %s5, %s298
        %p300 = scmp.lt.s32.totalorder %s27, 1
        %s301 = scalar_select %p300, %s27, 1
        %s302 = smul.addr %s301, 4
        %s303 = scalar_lea.vmem %s0, %s302
        %p304 = scmp.lt.s32.totalorder %s28, 1
        %s305 = scalar_select %p304, %s28, 1
        %s306 = scalar_lea.vmem %s2, %s305
        %p307 = scmp.lt.s32.totalorder %s27, 1
        %s308 = scalar_select %p307, %s27, 1
        %s309 = smul.addr %s308, 8
        %s310 = scalar_lea.vmem %s3, %s309
        %p311 = scmp.lt.s32.totalorder %s27, 1
        %s312 = scalar_select %p311, %s27, 1
        %s313 = smul.addr %s312, 8
        %s314 = scalar_lea.vmem %s5, %s313
        %p316 = scmp.eq.s32.totalorder %s28, 0
        // Predicated region
        $region41: #{tpu_custom_call.1} parent=35 // pred_check
          %p317 = pneg %p316
        $region42: #{tpu_custom_call.1} parent=35 // pred_check_branch
          %319 = sbr.rel (%p317) target = $region44
        $region43: #{tpu_custom_call.1} parent=35 // pred_region
          %vm320 = vcmask 7168
          %321 = vst.msk [vmem:[#allocation2] sm:$0xff] %vm320, -inf
          %322 = vst.msk [vmem:[#allocation3] sm:$0xff] %vm320, 0.0
          %323 = vst.msk [vmem:[#allocation4] sm:$0xff] %vm320, 0.0
        $region44: #{tpu_custom_call.1} parent=35 // pred_fallthru
          _
        %v324 = vld [vmem:[%s303] sm:$0xf]
        %v325 = vld [vmem:[%s258] sm:$0xf]
        %v326 = vld [vmem:[%s258 + $0x4] sm:$0xf]
        %v327 = vld [vmem:[%s258 + $0x8] sm:$0xf]
        %v328 = vld [vmem:[%s258 + $0xc] sm:$0xf]
        %v329 = vld [vmem:[%s258 + $0x10] sm:$0xf]
        %v330 = vld [vmem:[%s258 + $0x14] sm:$0xf]
        %v331 = vld [vmem:[%s258 + $0x18] sm:$0xf]
        %v332 = vld [vmem:[%s258 + $0x1c] sm:$0xf]
        %v333 = vld [vmem:[%s258 + $0x20] sm:$0xf]
        %v334 = vld [vmem:[%s258 + $0x24] sm:$0xf]
        %v335 = vld [vmem:[%s258 + $0x28] sm:$0xf]
        %v336 = vld [vmem:[%s258 + $0x2c] sm:$0xf]
        %v337 = vld [vmem:[%s258 + $0x30] sm:$0xf]
        %v338 = vld [vmem:[%s258 + $0x34] sm:$0xf]
        %v339 = vld [vmem:[%s258 + $0x38] sm:$0xf]
        %v340 = vld [vmem:[%s258 + $0x3c] sm:$0xf]
        %v341 = vld [vmem:[%s306] sm:$0x1]
        %v343 = vlaneseq
        %v344 = vshrl.u32 %v343, 7
        %v345 = vsub.s32 0, %v344
        %v346 = vrot.slane %v341, %v345
        %v364 = vunpack.c.l.b16 %v325
        %v365 = vunpack.c.l.b16 %v326
        %v366 = vunpack.c.l.b16 %v327
        %v367 = vunpack.c.l.b16 %v328
        %v368 = vunpack.c.l.b16 %v329
        %v369 = vunpack.c.l.b16 %v330
        %v370 = vunpack.c.l.b16 %v331
        %v371 = vunpack.c.l.b16 %v332
        %v372 = vunpack.c.l.b16 %v333
        %v373 = vunpack.c.l.b16 %v334
        %v374 = vunpack.c.l.b16 %v335
        %v375 = vunpack.c.l.b16 %v336
        %v376 = vunpack.c.l.b16 %v337
        %v377 = vunpack.c.l.b16 %v338
        %v378 = vunpack.c.l.b16 %v339
        %v379 = vunpack.c.l.b16 %v340
        %v380 = vpack.c.b16 %v365, %v364
        %v381 = vpack.c.b16 %v367, %v366
        %v382 = vpack.c.b16 %v369, %v368
        %v383 = vpack.c.b16 %v371, %v370
        %v384 = vpack.c.b16 %v373, %v372
        %v385 = vpack.c.b16 %v375, %v374
        %v386 = vpack.c.b16 %v377, %v376
        %v387 = vpack.c.b16 %v379, %v378
        %396 = vmatprep.subr.bf16.mxu0 0
        %397 = vmatpush1.bf16.msra.mxu0 %v380
        %398 = vmatprep.subr.bf16.mxu0 0
        %399 = vmatpush1.bf16.msra.mxu0 %v381
        %400 = vmatprep.subr.bf16.mxu0 0
        %401 = vmatpush1.bf16.msra.mxu0 %v382
        %402 = vmatprep.subr.bf16.mxu0 0
        %403 = vmatpush1.bf16.msra.mxu0 %v383
        %404 = vmatprep.subr.bf16.mxu0 0
        %405 = vmatpush1.bf16.msra.mxu0 %v384
        %406 = vmatprep.subr.bf16.mxu0 0
        %407 = vmatpush1.bf16.msra.mxu0 %v385
        %408 = vmatprep.subr.bf16.mxu0 0
        %409 = vmatpush1.bf16.msra.mxu0 %v386
        %410 = vmatprep.subr.bf16.mxu0 0
        %411 = vmatpush1.bf16.msra.mxu0 %v387
        %412 = vmatprep.subr.bf16.mxu0 0
        %413 = vmatpush1.bf16.msra.mxu0 0
        %414 = vmatprep.subr.bf16.mxu0 0
        %415 = vmatpush1.bf16.msra.mxu0 0
        %416 = vmatprep.subr.bf16.mxu0 0
        %417 = vmatpush1.bf16.msra.mxu0 0
        %418 = vmatprep.subr.bf16.mxu0 0
        %419 = vmatpush1.bf16.msra.mxu0 0
        %420 = vmatprep.subr.bf16.mxu0 0
        %421 = vmatpush1.bf16.msra.mxu0 0
        %422 = vmatprep.subr.bf16.mxu0 0
        %423 = vmatpush1.bf16.msra.mxu0 0
        %424 = vmatprep.subr.bf16.mxu0 0
        %425 = vmatpush1.bf16.msra.mxu0 0
        %426 = vmatprep.subr.bf16.mxu0 0
        %427 = vmatpush1.bf16.msra.mxu0 0
        %428 = vmatprep.mubr.bf16.mxu0 0
        %429 = vmatmul.mubr.bf16.gmra.mrb[0].mxu0 %v324
        %v430 = vpop.f32.mrb[0].mxu0
        %v431 = vadd.f32 %v346, %v430
        %v432 = vpop.f32.mrb[0].mxu0
        %v433 = vpop.f32.mrb[0].mxu0
        %v434 = vpop.f32.mrb[0].mxu0
        %435 = vdwg.mxu0
        %v436 = vpack.c.bf16 %v431, %v431
        %437 = vst [vmem:[%s293] sm:$0xf] %v436
        %v438 = vld [vmem:[#allocation2] sm:$0xff]
        %439 = vmax.xlane.f32.xlu0 %v431
        %v440 = vpop.xlane.xlu0 %439
        %v441 = vmax.f32 %v438, %v440
        %v442 = vld [vmem:[#allocation3] sm:$0xff]
        %v443 = vsub.f32 %v438, %v441
        %v444 = vmul.f32 %v443, 1.442695
        %v445 = vpow.pop %v444
        %v446 = vmul.f32 %v442, %v445
        %448 = vset.pattern.permute.xlu0 0
        %449 = vperm.xlu0 %448, %v441
        %v450 = vpop.permute.xlu0 %449
        %v452 = vsub.f32 %v431, %v450
        %v453 = vmul.f32 %v452, 1.442695
        %v454 = vpow.pop %v453
        %455 = vadd.xlane.f32.xlu0 %v454
        %v456 = vpop.xlane.xlu0 %455
        %v457 = vadd.f32 %v446, %v456
        %vm458 = vcmask 7168
        %459 = vst.msk [vmem:[#allocation3] sm:$0xff] %vm458, %v457
        %460 = vst.msk [vmem:[#allocation2] sm:$0xff] %vm458, %v441
        %v461 = vlaneseq
        %v462 = vand.u32 %v461, 127
        %s463 = smul.u32 %s28, 128
        %v464 = vstv %s463
        %v465 = vadd.s32 %v462, %v464
        %v466 = vld [vmem:[%s310] sm:$0xff]
        %467 = vset.pattern.permute.xlu0 0
        %468 = vperm.xlu0 %467, %v466
        %v469 = vpop.permute.xlu0 %468
        %vm470 = vcmp.eq.s32.totalorder %v465, %v469
        %v471 = vld [vmem:[#allocation4] sm:$0xff]
        %v472 = vsel %vm470, %v431, 0.0
        %473 = vadd.xlane.f32.xlu0 %v472
        %v474 = vpop.xlane.xlu0 %473
        %v475 = vadd.f32 %v471, %v474
        %476 = vst.msk [vmem:[#allocation4] sm:$0xff] %vm458, %v475
        %p477 = scmp.eq.s32.totalorder %s28, 1
        // Predicated region
        $region45: #{tpu_custom_call.1} parent=35 // pred_check
          %p478 = pneg %p477
        $region46: #{tpu_custom_call.1} parent=35 // pred_check_branch
          %480 = sbr.rel (%p478) target = $region48
        $region47: #{tpu_custom_call.1} parent=35 // pred_region
          %v481 = vld [vmem:[#allocation2] sm:$0xff]
          %v482 = vld [vmem:[#allocation3] sm:$0xff]
          %v483 = vlog2.pop %v482
          %v484 = vmul.f32 %v483, 0.6931472
          %v485 = vadd.f32 %v481, %v484
          %v486 = vld [vmem:[#allocation4] sm:$0xff]
          %v487 = vsub.f32 %v485, %v486
          %488 = vst.msk [vmem:[%s314] sm:$0xff] %vm458, %v487
        $region48: #{tpu_custom_call.1} parent=35 // pred_fallthru
          _
        %s489 = sand.u32 %s149, 1
        %s490 = scalar_lea.sflag [#allocation7], %s489
        %s491 = sand.u32 %s149, 1
        %s492 = smul.addr %s491, 4
        %s493 = scalar_lea.vmem [#allocation8], %s492
        %p494 = scmp.lt.s32.totalorder %s27, 1
        %s495 = scalar_select %p494, %s27, 1
        %s496 = smul.addr %s495, 8
        %s497 = scalar_lea.vmem %s5, %s496
        // Predicated region
        $region49: #{tpu_custom_call.1} parent=35 // pred_check
          %p498 = pneg %p159
        $region50: #{tpu_custom_call.1} parent=35 // pred_check_branch
          %500 = sbr.rel (%p498) target = $region52
        $region51: #{tpu_custom_call.1} parent=35 // pred_region
          %s502 = ssub.s32 64, 64
          %503 = vsyncadd %s490, %s502
          %s504 = smul.addr %s27, 2
          %s505 = sadd.s32 %s28, %s504
          %s506 = smul.addr %s505, 64
          %s507 = scalar_lea.hbm %s4, %s506
          %s509 = sshll.u32 %s493, 4
          %s510 = int_to_ptr.vmem [resolvable:$true] %s509
          %512 = dma.vmem_to_hbm [thread:$0]  %s510, 64, %s507, %s490
        $region52: #{tpu_custom_call.1} parent=35 // pred_fallthru
          _
        // Predicated region
        $region53: #{tpu_custom_call.1} parent=35 // pred_check
          %p513 = pneg %p185
        $region54: #{tpu_custom_call.1} parent=35 // pred_check_branch
          %515 = sbr.rel (%p513) target = $region56
        $region55: #{tpu_custom_call.1} parent=35 // pred_region
          _
        $region56: #{tpu_custom_call.1} parent=35 // pred_fallthru
          _
      $region36: #{tpu_custom_call.1} parent=5 // pred_fallthru
        _
      %p516 = scmp.le.s32.totalorder 2, %s18
      // Predicated region
      $region57: #{tpu_custom_call.1} parent=5 // pred_check
        %p517 = pneg %p516
      $region58: #{tpu_custom_call.1} parent=5 // pred_check_branch
        %519 = sbr.rel (%p517) target = $region60
      $region59: #{tpu_custom_call.1} parent=5 // pred_region
        %s520 = ssub.s32 %s18, 2
        // Predicated region
        $region61: #{tpu_custom_call.1} parent=59 // pred_check
          %p521 = pneg %p165
        $region62: #{tpu_custom_call.1} parent=59 // pred_check_branch
          %523 = sbr.rel (%p521) target = $region64
        $region63: #{tpu_custom_call.1} parent=59 // pred_region
          %s524 = sand.u32 %s150, 1
          %s525 = scalar_lea.sflag [#allocation7], %s524
          %s526 = sand.u32 %s150, 1
          %s527 = smul.addr %s526, 4
          %s528 = scalar_lea.vmem [#allocation8], %s527
          %529 = dma.done %s525, 64
        $region64: #{tpu_custom_call.1} parent=59 // pred_fallthru
          _
        // Predicated region
        $region65: #{tpu_custom_call.1} parent=59 // pred_check
          %p530 = pneg %p191
        $region66: #{tpu_custom_call.1} parent=59 // pred_check_branch
          %532 = sbr.rel (%p530) target = $region68
        $region67: #{tpu_custom_call.1} parent=59 // pred_region
          %p533 = scmp.lt.s32.totalorder %s29, 1
          %s534 = scalar_select %p533, %s29, 1
          %s535 = smul.addr %s534, 8
          %s536 = scalar_lea.vmem %s5, %s535
        $region68: #{tpu_custom_call.1} parent=59 // pred_fallthru
          _
      $region60: #{tpu_custom_call.1} parent=5 // pred_fallthru
        _
    $region6: #{tpu_custom_call.1} parent=1 // loop_footer
      %s22 = sadd.s32 1, %s18
    $region7: #{tpu_custom_call.1} parent=1 // loop_footer_branch
      %17 = sbr.rel target = $region3
    $region8: #{tpu_custom_call.1} parent=1 // loop_exit
      _
    %537 = vsyncpa [#allocation6], 1
    %s538 = scalar_lea.sflag [#allocation6], 1
    %539 = vsyncpa %s538, 1
    %540 = vsyncpa [#allocation7], 1
    %s541 = scalar_lea.sflag [#allocation7], 1
    %542 = vsyncpa %s541, 1

</llo_original>
